<compile_context>
chip_gen: v6e
topology: v6e:2x2x1
jax: 0.10.0
libtpu: 0.0.40
codegen_flags: <defaults>
</compile_context>

<pallas_src>
import jax
import jax.numpy as jnp
from jax.experimental import pallas as pl
from jax.experimental.pallas import tpu as pltpu


def _lse_kernel(b1_ref, w1_ref, w2s_ref, b2s_ref, x_ref, o_ref):
    # x_ref / o_ref : (1, C, THW) block — channels on sublanes, pixels lane-dense.
    # b1_ref  : (S,)   SMEM  fc1 bias (scalar reads).
    # w1_ref  : (C, S) VMEM  fc1 weight, transposed.
    # w2s_ref : (C, S) VMEM  fc2 weight, transposed, pre-scaled by 1/6.
    # b2s_ref : (C, 1) VMEM  fc2 bias, pre-folded:  b2/6 + 0.5.
    C, S = w1_ref.shape

    # Load + cast the block exactly once; reused by fc1 and the final scale*x.
    x_raw = x_ref[0]                              # (C, THW), native dtype
    xf = x_raw.astype(jnp.float32)                # (C, THW) f32

    # fc1 (1x1 conv) + ReLU:
    #   h[s] = relu(b1[s] + sum_c w1[c, s] * x[c, :])
    # Full-occupancy broadcast multiply + XLU sublane reduce (not a MAC chain).
    h = []
    for s in range(S):
        w_col = w1_ref[:, pl.ds(s, 1)].astype(jnp.float32)      # (C, 1)
        hs = jnp.sum(xf * w_col, axis=0, keepdims=True)         # (1, THW)
        h.append(jnp.maximum(hs + b1_ref[s], 0.0))

    # fc2 as rank-1 updates; hardsigmoid affine already folded into w2s/b2s:
    #   z = (b2/6 + 0.5) + sum_s (w2[s, :]/6)^T (x) h[s]          -> (C, THW)
    z = b2s_ref[...].astype(jnp.float32)                         # (C, 1)
    for s in range(S):
        z = z + w2s_ref[:, pl.ds(s, 1)].astype(jnp.float32) * h[s]

    # Hardsigmoid reduces to a clamp after the fold.
    scale = jnp.clip(z, 0.0, 1.0)

    if jnp.dtype(o_ref.dtype) == jnp.float32:
        o_ref[0] = (scale * xf).astype(o_ref.dtype)
    else:
        # 16-bit I/O (bf16/f16): cast scale down once, multiply in the narrow
        # dtype (half the vregs on v6e/v7x; v5e lowers back to f32 anyway).
        o_ref[0] = scale.astype(o_ref.dtype) * x_raw


def _round_up(x, m):
    return ((x + m - 1) // m) * m


def _num_tensorcores_per_chip():
    # Generation-aware core count (v7x = 2 TCs/chip); robust fallbacks.
    try:
        info = pltpu.get_tpu_info()
        for name in ("num_cores", "core_count", "num_tensorcores",
                     "tensorcores_per_chip", "cores_per_chip"):
            v = getattr(info, name, None)
            if isinstance(v, int) and v > 0:
                return v
    except Exception:
        pass
    try:
        kind = jax.devices()[0].device_kind.lower()
        if "v7" in kind:
            return 2
    except Exception:
        pass
    return 1


def _choose_tile_hw(B, C, HW, itemsize, num_tc):
    # ~2 MiB per x block (HBM-bound kernel; amortize ~0.35 us per-step overhead),
    # lane axis a multiple of 128.  No artificial lane cap beyond the byte target.
    target_bytes = 2 * 1024 * 1024
    tile = (target_bytes // max(1, C * itemsize)) // 128 * 128
    tile = max(128, tile)
    tile = min(tile, _round_up(HW, 128))
    if B == 1 and HW > 128:
        # Keep >= 2 grid steps per TensorCore (>= 2 total on 1-TC chips) so
        # prefetch/writeback overlap and v7x megacore sharding both work.
        min_steps = 2 * num_tc if num_tc > 1 else 2
        tile = min(tile, max(128, _round_up(pl.cdiv(HW, min_steps), 128)))
    return tile


@jax.jit
def local_squeeze_excitation(x_nchw, w1, b1, w2, b2):
    """x_nchw: (B, C, H, W).
    w1: (C, S) = fc1.weight[:, :, 0, 0].T, b1: (S,),
    w2: (S, C) = fc2.weight[:, :, 0, 0].T, b2: (C,)."""
    B, C, H, W = x_nchw.shape
    HW = H * W
    S = w1.shape[1]

    # Free view, no data movement: fold spatial dims onto the lane axis.
    x = x_nchw.reshape(B, C, HW)

    # Tiny parameter re-layouts + hardsigmoid fold (a few scalar flops on the
    # C*S weights, not on the data — genuine per-block VALU saving in-kernel).
    w2s = jnp.transpose(w2, (1, 0)) * (1.0 / 6.0)        # (C, S)
    b2s = (b2 * (1.0 / 6.0) + 0.5).reshape(C, 1)         # (C, 1)

    itemsize = jnp.dtype(x_nchw.dtype).itemsize
    num_tc = _num_tensorcores_per_chip()
    tile_hw = _choose_tile_hw(B, C, HW, itemsize, num_tc)
    grid = (B, pl.cdiv(HW, tile_hw))     # ragged last HW block handled by Pallas

    out = pl.pallas_call(
        _lse_kernel,
        out_shape=jax.ShapeDtypeStruct((B, C, HW), x_nchw.dtype),
        grid=grid,
        in_specs=[
            pl.BlockSpec(memory_space=pltpu.MemorySpace.SMEM),      # b1 (S,)
            pl.BlockSpec((C, S), lambda b, t: (0, 0)),              # w1 (C, S) VMEM
            pl.BlockSpec((C, S), lambda b, t: (0, 0)),              # w2s (C, S) VMEM
            pl.BlockSpec((C, 1), lambda b, t: (0, 0)),              # b2s (C, 1) VMEM
            pl.BlockSpec((1, C, tile_hw), lambda b, t: (b, 0, t)),  # x block
        ],
        out_specs=pl.BlockSpec((1, C, tile_hw), lambda b, t: (b, 0, t)),
        compiler_params=pltpu.CompilerParams(
            dimension_semantics=("parallel", "parallel"),
            # 2 MiB blocks: double-buffered in+out (~8 MiB) + f32 intermediates;
            # lift v5e's 16 MiB scoped default, still well under v7x's 64 MiB.
            vmem_limit_bytes=32 * 1024 * 1024,
        ),
    )(b1, w1, w2s, b2s, x)

    return out.reshape(B, C, H, W)


def _reference(x_nchw, w1, b1, w2, b2):
    # Pure-JAX reference of the PyTorch forward, directly in NCHW.
    x = x_nchw.astype(jnp.float32)
    h = jnp.maximum(jnp.einsum("bchw,cs->bshw", x, w1)
                    + b1[None, :, None, None], 0.0)
    z = jnp.einsum("bshw,sc->bchw", h, w2) + b2[None, :, None, None]
    scale = jnp.clip(z / 6.0 + 0.5, 0.0, 1.0)
    return (scale * x).astype(x_nchw.dtype)


if __name__ == "__main__":
    # Small shapes consistent with the module: B=2, C=4 input channels,
    # S=2 squeeze channels, 16x16 spatial.
    B, C, S, H, W = 2, 4, 2, 16, 16

    key = jax.random.PRNGKey(0)
    kx, k1, k2, k3, k4 = jax.random.split(key, 5)

    x = jax.random.normal(kx, (B, C, H, W), dtype=jnp.float32)

    # PyTorch fc1.weight has shape (S, C, 1, 1); we store its transpose (C, S)
    # so the 1x1 conv is per-pixel x @ w1.  Likewise fc2 -> (S, C).
    w1 = 0.2 * jax.random.normal(k1, (C, S), dtype=jnp.float32)
    b1 = 0.1 * jax.random.normal(k2, (S,), dtype=jnp.float32)
    w2 = 0.2 * jax.random.normal(k3, (S, C), dtype=jnp.float32)
    b2 = 0.1 * jax.random.normal(k4, (C,), dtype=jnp.float32)

    out = jax.block_until_ready(local_squeeze_excitation(x, w1, b1, w2, b2))
    ref = _reference(x, w1, b1, w2, b2)

    assert out.shape == (B, C, H, W)
    assert jnp.allclose(out, ref, atol=1e-5, rtol=1e-5), "mismatch vs reference"

    # TODO(synk): self.avgpool is declared in __init__ but never used in forward (forward calls
    # _scale = fc1->relu->fc2->hardsigmoid with no pooling), so it is intentionally omitted.
    print("KERNEL_OK")
</pallas_src>

<mosaic_0001>
module attributes {stable_mosaic.version = 11 : i64} {
  func.func @_lse_kernel(%arg0: i32, %arg1: i32, %arg2: memref<2xf32, #tpu.memory_space<smem>>, %arg3: memref<4x2xf32, #tpu.memory_space<vmem>>, %arg4: memref<4x2xf32, #tpu.memory_space<vmem>>, %arg5: memref<4x1xf32, #tpu.memory_space<vmem>>, %arg6: memref<1x4x256xf32, #tpu.memory_space<vmem>>, %arg7: memref<1x4x256xf32, #tpu.memory_space<vmem>>) attributes {dimension_semantics = [#tpu.dimension_semantics<parallel>, #tpu.dimension_semantics<parallel>], iteration_bounds = array<i64: 2, 1>, scalar_prefetch = 0 : i64, scratch_operands = 0 : i64, tpu.core_type = #tpu.core_type<tc>, window_params = [{transform_indices = @transform_0, window_bounds = array<i64: 2>}, {pipeline_mode = #tpu.pipeline_mode<synchronous>, transform_indices = @transform_1, window_bounds = array<i64: 4, 2>}, {pipeline_mode = #tpu.pipeline_mode<synchronous>, transform_indices = @transform_2, window_bounds = array<i64: 4, 2>}, {pipeline_mode = #tpu.pipeline_mode<synchronous>, transform_indices = @transform_3, window_bounds = array<i64: 4, 1>}, {transform_indices = @transform_4, window_bounds = array<i64: 1, 4, 256>}, {transform_indices = @transform_5, window_bounds = array<i64: 1, 4, 256>}]} {
    %c0 = arith.constant 0 : index
    %c0_0 = arith.constant 0 : index
    %c0_1 = arith.constant 0 : index
    %0 = vector.load %arg6[%c0, %c0_0, %c0_1] : memref<1x4x256xf32, #tpu.memory_space<vmem>>, vector<1x4x256xf32>
    %1 = vector.shape_cast %0 : vector<1x4x256xf32> to vector<4x256xf32>
    %c0_2 = arith.constant 0 : index
    %c0_3 = arith.constant 0 : index
    %2 = vector.load %arg3[%c0_2, %c0_3] : memref<4x2xf32, #tpu.memory_space<vmem>>, vector<4x1xf32>
    %3 = vector.broadcast %2 : vector<4x1xf32> to vector<4x256xf32>
    %4 = arith.mulf %1, %3 : vector<4x256xf32>
    %cst = arith.constant dense<0.000000e+00> : vector<256xf32>
    %5 = vector.multi_reduction <add>, %4, %cst [0] : vector<4x256xf32> to vector<256xf32>
    %6 = vector.shape_cast %5 : vector<256xf32> to vector<1x256xf32>
    %c0_4 = arith.constant 0 : index
    %7 = memref.load %arg2[%c0_4] : memref<2xf32, #tpu.memory_space<smem>>
    %8 = vector.broadcast %7 : f32 to vector<1x256xf32>
    %9 = arith.addf %6, %8 : vector<1x256xf32>
    %cst_5 = arith.constant 0.000000e+00 : f32
    %10 = vector.broadcast %cst_5 : f32 to vector<1x256xf32>
    %11 = arith.maximumf %9, %10 : vector<1x256xf32>
    %c0_6 = arith.constant 0 : index
    %c1 = arith.constant 1 : index
    %12 = vector.load %arg3[%c0_6, %c1] : memref<4x2xf32, #tpu.memory_space<vmem>>, vector<4x1xf32>
    %13 = vector.broadcast %12 : vector<4x1xf32> to vector<4x256xf32>
    %14 = arith.mulf %1, %13 : vector<4x256xf32>
    %cst_7 = arith.constant dense<0.000000e+00> : vector<256xf32>
    %15 = vector.multi_reduction <add>, %14, %cst_7 [0] : vector<4x256xf32> to vector<256xf32>
    %16 = vector.shape_cast %15 : vector<256xf32> to vector<1x256xf32>
    %c1_8 = arith.constant 1 : index
    %17 = memref.load %arg2[%c1_8] : memref<2xf32, #tpu.memory_space<smem>>
    %18 = vector.broadcast %17 : f32 to vector<1x256xf32>
    %19 = arith.addf %16, %18 : vector<1x256xf32>
    %cst_9 = arith.constant 0.000000e+00 : f32
    %20 = vector.broadcast %cst_9 : f32 to vector<1x256xf32>
    %21 = arith.maximumf %19, %20 : vector<1x256xf32>
    %c0_10 = arith.constant 0 : index
    %c0_11 = arith.constant 0 : index
    %22 = vector.load %arg5[%c0_10, %c0_11] : memref<4x1xf32, #tpu.memory_space<vmem>>, vector<4x1xf32>
    %c0_12 = arith.constant 0 : index
    %c0_13 = arith.constant 0 : index
    %23 = vector.load %arg4[%c0_12, %c0_13] : memref<4x2xf32, #tpu.memory_space<vmem>>, vector<4x1xf32>
    %24 = vector.broadcast %23 : vector<4x1xf32> to vector<4x256xf32>
    %25 = vector.broadcast %11 : vector<1x256xf32> to vector<4x256xf32>
    %26 = arith.mulf %24, %25 : vector<4x256xf32>
    %27 = vector.broadcast %22 : vector<4x1xf32> to vector<4x256xf32>
    %28 = arith.addf %27, %26 : vector<4x256xf32>
    %c0_14 = arith.constant 0 : index
    %c1_15 = arith.constant 1 : index
    %29 = vector.load %arg4[%c0_14, %c1_15] : memref<4x2xf32, #tpu.memory_space<vmem>>, vector<4x1xf32>
    %30 = vector.broadcast %29 : vector<4x1xf32> to vector<4x256xf32>
    %31 = vector.broadcast %21 : vector<1x256xf32> to vector<4x256xf32>
    %32 = arith.mulf %30, %31 : vector<4x256xf32>
    %33 = arith.addf %28, %32 : vector<4x256xf32>
    %cst_16 = arith.constant 0.000000e+00 : f32
    %cst_17 = arith.constant 1.000000e+00 : f32
    %34 = vector.broadcast %cst_16 : f32 to vector<4x256xf32>
    %35 = arith.maximumf %34, %33 : vector<4x256xf32>
    %36 = vector.broadcast %cst_17 : f32 to vector<4x256xf32>
    %37 = arith.minimumf %36, %35 : vector<4x256xf32>
    %38 = arith.mulf %37, %1 : vector<4x256xf32>
    %c0_18 = arith.constant 0 : index
    %c0_19 = arith.constant 0 : index
    %c0_20 = arith.constant 0 : index
    %39 = vector.load %arg7[%c0_18, %c0_19, %c0_20] : memref<1x4x256xf32, #tpu.memory_space<vmem>>, vector<1x4x256xf32>
    %40 = vector.shape_cast %39 : vector<1x4x256xf32> to vector<4x256xf32>
    %41 = vector.shape_cast %38 : vector<4x256xf32> to vector<1x4x256xf32>
    tpu.vector_store %arg7[%c0_18, %c0_19, %c0_20], %41 {strides = array<i32>} : memref<1x4x256xf32, #tpu.memory_space<vmem>>, vector<1x4x256xf32>,
    return
  }
  func.func @transform_0(%arg0: i32, %arg1: i32) -> i32 {
    %c0_i32 = arith.constant 0 : i32
    %c0_i32_0 = arith.constant 0 : i32
    return %c0_i32 : i32
  }
  func.func @transform_1(%arg0: i32, %arg1: i32) -> (i32, i32) {
    %c0_i32 = arith.constant 0 : i32
    %c0_i32_0 = arith.constant 0 : i32
    %c0_i32_1 = arith.constant 0 : i32
    return %c0_i32, %c0_i32_0 : i32, i32
  }
  func.func @transform_2(%arg0: i32, %arg1: i32) -> (i32, i32) {
    %c0_i32 = arith.constant 0 : i32
    %c0_i32_0 = arith.constant 0 : i32
    %c0_i32_1 = arith.constant 0 : i32
    return %c0_i32, %c0_i32_0 : i32, i32
  }
  func.func @transform_3(%arg0: i32, %arg1: i32) -> (i32, i32) {
    %c0_i32 = arith.constant 0 : i32
    %c0_i32_0 = arith.constant 0 : i32
    %c0_i32_1 = arith.constant 0 : i32
    return %c0_i32, %c0_i32_0 : i32, i32
  }
  func.func @transform_4(%arg0: i32, %arg1: i32) -> (i32, i32, i32) {
    %c0_i32 = arith.constant 0 : i32
    %c0_i32_0 = arith.constant 0 : i32
    return %arg0, %c0_i32, %arg1 : i32, i32, i32
  }
  func.func @transform_5(%arg0: i32, %arg1: i32) -> (i32, i32, i32) {
    %c0_i32 = arith.constant 0 : i32
    %c0_i32_0 = arith.constant 0 : i32
    return %arg0, %c0_i32, %arg1 : i32, i32, i32
  }
}

</mosaic_0001>

<llo_original>
// kernel: local_squeeze_excitation.1
$region0: #{local_squeeze_excitation.1}
  #allocation0 [shape = 'u32[]', space=smem, size = 0x4, offset = 0x4, fixed_abs, tag = 'smem constant byte address 0x4 - core index']
  #allocation1 [shape = 'u32[144,128]{1,0:T(1,128)}', space=vmem, size = 0x12000, scoped, tag = 'internal scratch']
  %s0 = inlined_call_operand.vmem [shape: f32[2], index: 0, kind: input, shape index: {}]
  %s1 = inlined_call_operand.vmem [shape: f32[4,2], index: 1, kind: input, shape index: {}]
  %s2 = inlined_call_operand.vmem [shape: f32[4,2], index: 2, kind: input, shape index: {}]
  %s3 = inlined_call_operand.vmem [shape: f32[4,1], index: 3, kind: input, shape index: {}]
  %s4 = inlined_call_operand.vmem [shape: f32[2,4,256], index: 4, kind: input, shape index: {}]
  %s5 = inlined_call_operand.vmem [shape: f32[2,4,256], index: 5, kind: output, shape index: {}]
  %s6 = sld [smem:[#allocation0]]
  $region57: #{local_squeeze_excitation.1} parent=0
    _
  %s8 = ssub.s32 1, %s6
  %s9 = scalar_select 0, %s8, %s6
  $region1: #{local_squeeze_excitation.1} parent=0
    #allocation2 [shape = 'u8[512]{0}', space=smem, size = 0x200, scoped, tag = 'input window, operand 0, single buffered']
    #allocation3 [shape = 's32[2]{0}', space=sflag, size = 0x8, scoped, tag = 'scoped memory for local_squeeze_excitation.1']
    %10 = vsyncpa [#allocation3], 0
    loop: start=0, step=1, limit=4
    $region2: #{local_squeeze_excitation.1} parent=1 // loop_pre_header
      _
    $region3: #{local_squeeze_excitation.1} parent=1 // loop_header
      %s12 = sphi 0, %s16
      %p13 = scmp.ge.s32.totalorder %s12, 4
      %s19 = sphi 0, %s31
      %s20 = sphi 0, %s27
      %s21 = sphi 0, %s19
      %s22 = sphi 0, %s20
      %s23 = sphi 0, %s21
      %s24 = sphi 0, %s22
      %s32 = sphi 0, %s32
      %s34 = sphi 0, %s32
      %s35 = sphi 0, %s34
      %s49 = sphi 0, %s35
      %s53 = sphi 0, %s53
      %s55 = sphi 0, %s53
      %s56 = sphi 0, %s55
      %s70 = sphi 0, %s56
      %s74 = sphi 0, %s74
      %s76 = sphi 0, %s74
      %s77 = sphi 0, %s76
      %s91 = sphi 0, %s77
      %s95 = sphi 0, %s95
      %s97 = sphi 0, %s95
      %s98 = sphi 0, %s97
      %s112 = sphi 0, %s98
      %s120 = sphi 0, %s122
      %s123 = sphi 0, %s120
      %s124 = sphi 0, %s123
      %s140 = sphi 0, %s124
      %s148 = sphi 0, %s150
      %s151 = sphi 0, %s148
      %s152 = sphi 0, %s151
      %s168 = sphi 0, %s152
    $region4: #{local_squeeze_excitation.1} parent=1 // loop_header_branch
      %15 = sbr.rel (%p13) target = $region8
    $region5: #{local_squeeze_excitation.1} parent=1 // loop_body
      %s17 = ssub.s32 %s12, 1
      %s18 = ssub.s32 %s12, 2
      %s25 = sadd.s32 1, %s20
      %p26 = scmp.ge.s32.totalorder %s25, 1
      %s27 = scalar_select %p26, 0, %s25
      %s28 = sadd.s32 1, %s19
      %s29 = scalar_select %p26, %s28, %s19
      %p30 = scmp.ge.s32.totalorder %s29, 2
      %s31 = scalar_select %p30, 0, %s29
      %s33 = sadd.s32 %s32, 1
      %p36 = scmp.eq.s32.totalorder %s12, 1
      %p37 = scmp.ne.s32.totalorder %s32, %s34
      %p38 = scmp.eq.s32.totalorder %s12, 0
      %p39 = por %p37, %p38
      %p40 = scmp.ne.s32.totalorder %s32, %s34
      %p41 = scmp.eq.s32.totalorder %s17, 1
      %p42 = por %p40, %p41
      %p43 = scmp.ne.s32.totalorder %s34, %s35
      %p44 = scmp.eq.s32.totalorder %s17, 0
      %p45 = por %p43, %p44
      %p46 = scmp.ne.s32.totalorder %s34, %s35
      %p47 = scmp.eq.s32.totalorder %s18, 1
      %p48 = por %p46, %p47
      %p50 = scmp.ne.s32.totalorder %s35, %s49
      %p51 = scmp.eq.s32.totalorder %s18, 0
      %p52 = por %p50, %p51
      %s54 = sadd.s32 %s53, 1
      %p57 = scmp.eq.s32.totalorder %s12, 1
      %p58 = scmp.ne.s32.totalorder %s53, %s55
      %p59 = scmp.eq.s32.totalorder %s12, 0
      %p60 = por %p58, %p59
      %p61 = scmp.ne.s32.totalorder %s53, %s55
      %p62 = scmp.eq.s32.totalorder %s17, 1
      %p63 = por %p61, %p62
      %p64 = scmp.ne.s32.totalorder %s55, %s56
      %p65 = scmp.eq.s32.totalorder %s17, 0
      %p66 = por %p64, %p65
      %p67 = scmp.ne.s32.totalorder %s55, %s56
      %p68 = scmp.eq.s32.totalorder %s18, 1
      %p69 = por %p67, %p68
      %p71 = scmp.ne.s32.totalorder %s56, %s70
      %p72 = scmp.eq.s32.totalorder %s18, 0
      %p73 = por %p71, %p72
      %s75 = sadd.s32 %s74, 1
      %p78 = scmp.eq.s32.totalorder %s12, 1
      %p79 = scmp.ne.s32.totalorder %s74, %s76
      %p80 = scmp.eq.s32.totalorder %s12, 0
      %p81 = por %p79, %p80
      %p82 = scmp.ne.s32.totalorder %s74, %s76
      %p83 = scmp.eq.s32.totalorder %s17, 1
      %p84 = por %p82, %p83
      %p85 = scmp.ne.s32.totalorder %s76, %s77
      %p86 = scmp.eq.s32.totalorder %s17, 0
      %p87 = por %p85, %p86
      %p88 = scmp.ne.s32.totalorder %s76, %s77
      %p89 = scmp.eq.s32.totalorder %s18, 1
      %p90 = por %p88, %p89
      %p92 = scmp.ne.s32.totalorder %s77, %s91
      %p93 = scmp.eq.s32.totalorder %s18, 0
      %p94 = por %p92, %p93
      %s96 = sadd.s32 %s95, 1
      %p99 = scmp.eq.s32.totalorder %s12, 1
      %p100 = scmp.ne.s32.totalorder %s95, %s97
      %p101 = scmp.eq.s32.totalorder %s12, 0
      %p102 = por %p100, %p101
      %p103 = scmp.ne.s32.totalorder %s95, %s97
      %p104 = scmp.eq.s32.totalorder %s17, 1
      %p105 = por %p103, %p104
      %p106 = scmp.ne.s32.totalorder %s97, %s98
      %p107 = scmp.eq.s32.totalorder %s17, 0
      %p108 = por %p106, %p107
      %p109 = scmp.ne.s32.totalorder %s97, %s98
      %p110 = scmp.eq.s32.totalorder %s18, 1
      %p111 = por %p109, %p110
      %p113 = scmp.ne.s32.totalorder %s98, %s112
      %p114 = scmp.eq.s32.totalorder %s18, 0
      %p115 = por %p113, %p114
      %s116 = ssub.s32 %s19, %s31
      %s117 = ssub.s32 %s20, %s27
      %s118 = sor.u32 %s116, %s117
      %p119 = scmp.eq.s32.totalorder %s118, 0
      %s121 = sadd.s32 %s120, 1
      %s122 = scalar_select %p119, %s120, %s121
      %p125 = pneg %p119
      %p126 = scmp.eq.s32.totalorder %s12, 1
      %p127 = por %p125, %p126
      %p128 = scmp.ne.s32.totalorder %s120, %s123
      %p129 = scmp.eq.s32.totalorder %s12, 0
      %p130 = por %p128, %p129
      %p131 = scmp.ne.s32.totalorder %s120, %s123
      %p132 = scmp.eq.s32.totalorder %s17, 1
      %p133 = por %p131, %p132
      %p134 = scmp.ne.s32.totalorder %s123, %s124
      %p135 = scmp.eq.s32.totalorder %s17, 0
      %p136 = por %p134, %p135
      %p137 = scmp.ne.s32.totalorder %s123, %s124
      %p138 = scmp.eq.s32.totalorder %s18, 1
      %p139 = por %p137, %p138
      %p141 = scmp.ne.s32.totalorder %s124, %s140
      %p142 = scmp.eq.s32.totalorder %s18, 0
      %p143 = por %p141, %p142
      %s144 = ssub.s32 %s19, %s31
      %s145 = ssub.s32 %s20, %s27
      %s146 = sor.u32 %s144, %s145
      %p147 = scmp.eq.s32.totalorder %s146, 0
      %s149 = sadd.s32 %s148, 1
      %s150 = scalar_select %p147, %s148, %s149
      %p153 = pneg %p147
      %p154 = scmp.eq.s32.totalorder %s12, 1
      %p155 = por %p153, %p154
      %p156 = scmp.ne.s32.totalorder %s148, %s151
      %p157 = scmp.eq.s32.totalorder %s12, 0
      %p158 = por %p156, %p157
      %p159 = scmp.ne.s32.totalorder %s148, %s151
      %p160 = scmp.eq.s32.totalorder %s17, 1
      %p161 = por %p159, %p160
      %p162 = scmp.ne.s32.totalorder %s151, %s152
      %p163 = scmp.eq.s32.totalorder %s17, 0
      %p164 = por %p162, %p163
      %p165 = scmp.ne.s32.totalorder %s151, %s152
      %p166 = scmp.eq.s32.totalorder %s18, 1
      %p167 = por %p165, %p166
      %p169 = scmp.ne.s32.totalorder %s152, %s168
      %p170 = scmp.eq.s32.totalorder %s18, 0
      %p171 = por %p169, %p170
      %p172 = scmp.le.s32.totalorder 1, %s12
      %p173 = scmp.lt.s32.totalorder %s12, 3
      %p174 = pnand %p172, %p173
      %p175 = pneg %p174
      // Predicated region
      $region9: #{local_squeeze_excitation.1} parent=5 // pred_check
        _
      $region10: #{local_squeeze_excitation.1} parent=5 // pred_check_branch
        %177 = sbr.rel (%p174) target = $region12
      $region11: #{local_squeeze_excitation.1} parent=5 // pred_region
        %s178 = ssub.s32 %s12, 1
        // Predicated region
        $region13: #{local_squeeze_excitation.1} parent=11 // pred_check
          %p179 = pneg %p45
        $region14: #{local_squeeze_excitation.1} parent=11 // pred_check_branch
          %181 = sbr.rel (%p179) target = $region16
        $region15: #{local_squeeze_excitation.1} parent=11 // pred_region
          %s183 = ssub.s32 16, 16
          %184 = vsyncadd [#allocation3], %s183
          %s186 = sshll.u32 %s0, 4
          %s187 = int_to_ptr.vmem [resolvable:$true] %s186
          %189 = dma.vmem_to_smem %s187, 16, [#allocation2], [#allocation3]
        $region16: #{local_squeeze_excitation.1} parent=11 // pred_fallthru
          _
        // Predicated region
        $region17: #{local_squeeze_excitation.1} parent=11 // pred_check
          %p190 = pneg %p66
        $region18: #{local_squeeze_excitation.1} parent=11 // pred_check_branch
          %192 = sbr.rel (%p190) target = $region20
        $region19: #{local_squeeze_excitation.1} parent=11 // pred_region
          _
        $region20: #{local_squeeze_excitation.1} parent=11 // pred_fallthru
          _
        // Predicated region
        $region21: #{local_squeeze_excitation.1} parent=11 // pred_check
          %p193 = pneg %p87
        $region22: #{local_squeeze_excitation.1} parent=11 // pred_check_branch
          %195 = sbr.rel (%p193) target = $region24
        $region23: #{local_squeeze_excitation.1} parent=11 // pred_region
          _
        $region24: #{local_squeeze_excitation.1} parent=11 // pred_fallthru
          _
        // Predicated region
        $region25: #{local_squeeze_excitation.1} parent=11 // pred_check
          %p196 = pneg %p108
        $region26: #{local_squeeze_excitation.1} parent=11 // pred_check_branch
          %198 = sbr.rel (%p196) target = $region28
        $region27: #{local_squeeze_excitation.1} parent=11 // pred_region
          _
        $region28: #{local_squeeze_excitation.1} parent=11 // pred_fallthru
          _
      $region12: #{local_squeeze_excitation.1} parent=5 // pred_fallthru
        _
      %p199 = scmp.lt.s32.totalorder %s12, 2
      // Predicated region
      $region29: #{local_squeeze_excitation.1} parent=5 // pred_check
        %p200 = pneg %p199
      $region30: #{local_squeeze_excitation.1} parent=5 // pred_check_branch
        %202 = sbr.rel (%p200) target = $region32
      $region31: #{local_squeeze_excitation.1} parent=5 // pred_region
        // Predicated region
        $region33: #{local_squeeze_excitation.1} parent=31 // pred_check
          %p203 = pneg %p130
        $region34: #{local_squeeze_excitation.1} parent=31 // pred_check_branch
          %205 = sbr.rel (%p203) target = $region36
        $region35: #{local_squeeze_excitation.1} parent=31 // pred_region
          %s206 = smul.u32 2, %s20
          %p207 = scmp.lt.s32.totalorder %s19, 1
          %s208 = scalar_select %p207, %s19, 1
          %p209 = scmp.lt.s32.totalorder %s206, 1
          %s210 = scalar_select %p209, %s206, 1
          %s211 = smul.addr %s208, 2
          %s212 = sadd.s32 %s210, %s211
          %s213 = smul.addr %s212, 4
          %s214 = scalar_lea.vmem %s4, %s213
          %s215 = smul.u32 2, %s20
        $region36: #{local_squeeze_excitation.1} parent=31 // pred_fallthru
          _
      $region32: #{local_squeeze_excitation.1} parent=5 // pred_fallthru
        _
      %p216 = scmp.le.s32.totalorder 1, %s12
      %p217 = scmp.lt.s32.totalorder %s12, 3
      %p218 = pnand %p216, %p217
      %p219 = pneg %p218
      // Predicated region
      $region37: #{local_squeeze_excitation.1} parent=5 // pred_check
        _
      $region38: #{local_squeeze_excitation.1} parent=5 // pred_check_branch
        %221 = sbr.rel (%p218) target = $region40
      $region39: #{local_squeeze_excitation.1} parent=5 // pred_region
        %s222 = ssub.s32 %s12, 1
        // Predicated region
        $region41: #{local_squeeze_excitation.1} parent=39 // pred_check
          %p223 = pneg %p45
        $region42: #{local_squeeze_excitation.1} parent=39 // pred_check_branch
          %225 = sbr.rel (%p223) target = $region44
        $region43: #{local_squeeze_excitation.1} parent=39 // pred_region
          %226 = dma.done [#allocation3], 16
        $region44: #{local_squeeze_excitation.1} parent=39 // pred_fallthru
          _
        %227 = sfence
        %p228 = pneg %p45
        %p229 = pneg %p42
        %p230 = pneg %p66
        %p231 = pneg %p63
        %p232 = pneg %p87
        %p233 = pneg %p84
        %p234 = pneg %p108
        %p235 = pneg %p105
        %s236 = smul.u32 2, %s22
        %p237 = scmp.lt.s32.totalorder %s21, 1
        %s238 = scalar_select %p237, %s21, 1
        %p239 = scmp.lt.s32.totalorder %s236, 1
        %s240 = scalar_select %p239, %s236, 1
        %s241 = smul.addr %s238, 2
        %s242 = sadd.s32 %s240, %s241
        %s243 = smul.addr %s242, 4
        %s244 = scalar_lea.vmem %s4, %s243
        %p245 = pneg %p136
        %p246 = pneg %p133
        %p247 = pneg %p164
        %p248 = pneg %p161
        %s249 = smul.u32 2, %s22
        %p250 = scmp.lt.s32.totalorder %s21, 1
        %s251 = scalar_select %p250, %s21, 1
        %p252 = scmp.lt.s32.totalorder %s249, 1
        %s253 = scalar_select %p252, %s249, 1
        %s254 = smul.addr %s251, 2
        %s255 = sadd.s32 %s253, %s254
        %s256 = smul.addr %s255, 4
        %s257 = scalar_lea.vmem %s5, %s256
        %s258 = smul.u32 2, %s22
        %p259 = scmp.lt.s32.totalorder %s21, 1
        %s260 = scalar_select %p259, %s21, 1
        %p261 = scmp.lt.s32.totalorder %s258, 1
        %s262 = scalar_select %p261, %s258, 1
        %s263 = smul.addr %s260, 2
        %s264 = sadd.s32 %s262, %s263
        %s265 = smul.addr %s264, 4
        %s266 = scalar_lea.vmem %s4, %s265
        %s267 = smul.u32 2, %s22
        %s268 = smul.u32 2, %s22
        %p269 = scmp.lt.s32.totalorder %s21, 1
        %s270 = scalar_select %p269, %s21, 1
        %p271 = scmp.lt.s32.totalorder %s268, 1
        %s272 = scalar_select %p271, %s268, 1
        %s273 = smul.addr %s270, 2
        %s274 = sadd.s32 %s272, %s273
        %s275 = smul.addr %s274, 4
        %s276 = scalar_lea.vmem %s5, %s275
        %s277 = smul.u32 2, %s22
        %v278 = vld [vmem:[%s266] sm:$0xff]
        %v279 = vld [vmem:[%s1] sm:$0xf]
        %281 = vset.pattern.permute.xlu0 0
        %282 = vperm.xlu0 %281, %v279
        %v283 = vpop.permute.xlu0 %282
        %v285 = vunpack.c.l.s4 839922192
        %v286 = vunpack.c.0.s8 %v285
        %v287 = vlaneseq
        %v288 = vshrl.u32 %v287, 7
        %v289 = vsub.s32 %v286, %v288
        %v290 = vrot.slane %v283, %v289
        %v292 = vmul.f32 %v278, %v290
        %v294 = vcombine.high %v292, %v292
        %vm296 = vcmask 1043456
        %v297 = vsel %vm296, %v292, 0.0
        %v298 = vrot.slane %v297, 4
        %v299 = vadd.f32 %v297, %v298
        %v300 = vrot.slane %v299, 2
        %v301 = vadd.f32 %v299, %v300
        %v302 = vrot.slane %v301, 1
        %v303 = vadd.f32 %v301, %v302
        %v304 = vsel %vm296, %v294, 0.0
        %v305 = vrot.slane %v304, 4
        %v306 = vadd.f32 %v304, %v305
        %v307 = vrot.slane %v306, 2
        %v308 = vadd.f32 %v306, %v307
        %v309 = vrot.slane %v308, 1
        %v310 = vadd.f32 %v308, %v309
        %s311 = sld [smem:[#allocation2]]
        %v312 = vstv %s311
        %v313 = vadd.f32 %v303, %v312
        %v314 = vadd.f32 %v310, %v312
        %v315 = vmax.f32 %v313, 0.0
        %v316 = vmax.f32 %v314, 0.0
        %v317 = vld [vmem:[%s1] sm:$0xf]
        %319 = vset.pattern.permute.xlu0 1
        %320 = vperm.xlu0 %319, %v317
        %v321 = vpop.permute.xlu0 %320
        %v323 = vunpack.c.l.s4 839922192
        %v324 = vunpack.c.0.s8 %v323
        %v325 = vlaneseq
        %v326 = vshrl.u32 %v325, 7
        %v327 = vsub.s32 %v324, %v326
        %v328 = vrot.slane %v321, %v327
        %v330 = vmul.f32 %v278, %v328
        %v332 = vcombine.high %v330, %v330
        %v334 = vsel %vm296, %v330, 0.0
        %v335 = vrot.slane %v334, 4
        %v336 = vadd.f32 %v334, %v335
        %v337 = vrot.slane %v336, 2
        %v338 = vadd.f32 %v336, %v337
        %v339 = vrot.slane %v338, 1
        %v340 = vadd.f32 %v338, %v339
        %v341 = vsel %vm296, %v332, 0.0
        %v342 = vrot.slane %v341, 4
        %v343 = vadd.f32 %v341, %v342
        %v344 = vrot.slane %v343, 2
        %v345 = vadd.f32 %v343, %v344
        %v346 = vrot.slane %v345, 1
        %v347 = vadd.f32 %v345, %v346
        %s348 = sld [smem:[#allocation2 + $0x1]]
        %v349 = vstv %s348
        %v350 = vadd.f32 %v340, %v349
        %v351 = vadd.f32 %v347, %v349
        %v352 = vmax.f32 %v350, 0.0
        %v353 = vmax.f32 %v351, 0.0
        %v354 = vld [vmem:[%s3] sm:$0xf]
        %v355 = vld [vmem:[%s2] sm:$0xf]
        %357 = vset.pattern.permute.xlu0 0
        %358 = vperm.xlu0 %357, %v355
        %v359 = vpop.permute.xlu0 %358
        %v361 = vmul.f32 %v359, %v315
        %v362 = vmul.f32 %v359, %v316
        %364 = vset.pattern.permute.xlu0 0
        %365 = vperm.xlu0 %364, %v354
        %v366 = vpop.permute.xlu0 %365
        %v368 = vadd.f32 %v366, %v361
        %v369 = vadd.f32 %v366, %v362
        %370 = vset.pattern.permute.xlu0 1
        %371 = vperm.xlu0 %370, %v355
        %v372 = vpop.permute.xlu0 %371
        %v374 = vmul.f32 %v372, %v352
        %v375 = vmul.f32 %v372, %v353
        %v376 = vadd.f32 %v368, %v374
        %v377 = vadd.f32 %v369, %v375
        %v378 = vmax.f32 %v376, 0.0
        %v379 = vmax.f32 %v377, 0.0
        %v380 = vmin.f32 %v378, 1.0
        %v381 = vmin.f32 %v379, 1.0
        %v383 = vcombine.high %v278, %v278
        %v385 = vmul.f32 %v380, %v278
        %v386 = vmul.f32 %v381, %v383
        %v389 = vcombine.low %v385, %v386
        %391 = vst [vmem:[%s276] sm:$0xff] %v389
        %s392 = smul.u32 2, %s22
        %p393 = scmp.lt.s32.totalorder %s21, 1
        %s394 = scalar_select %p393, %s21, 1
        %p395 = scmp.lt.s32.totalorder %s392, 1
        %s396 = scalar_select %p395, %s392, 1
        %s397 = smul.addr %s394, 2
        %s398 = sadd.s32 %s396, %s397
        %s399 = smul.addr %s398, 4
        %s400 = scalar_lea.vmem %s5, %s399
        // Predicated region
        $region45: #{local_squeeze_excitation.1} parent=39 // pred_check
          %p401 = pneg %p161
        $region46: #{local_squeeze_excitation.1} parent=39 // pred_check_branch
          %403 = sbr.rel (%p401) target = $region48
        $region47: #{local_squeeze_excitation.1} parent=39 // pred_region
          %s404 = smul.u32 2, %s22
        $region48: #{local_squeeze_excitation.1} parent=39 // pred_fallthru
          _
      $region40: #{local_squeeze_excitation.1} parent=5 // pred_fallthru
        _
      %p405 = scmp.le.s32.totalorder 2, %s12
      // Predicated region
      $region49: #{local_squeeze_excitation.1} parent=5 // pred_check
        %p406 = pneg %p405
      $region50: #{local_squeeze_excitation.1} parent=5 // pred_check_branch
        %408 = sbr.rel (%p406) target = $region52
      $region51: #{local_squeeze_excitation.1} parent=5 // pred_region
        %s409 = ssub.s32 %s12, 2
        // Predicated region
        $region53: #{local_squeeze_excitation.1} parent=51 // pred_check
          %p410 = pneg %p167
        $region54: #{local_squeeze_excitation.1} parent=51 // pred_check_branch
          %412 = sbr.rel (%p410) target = $region56
        $region55: #{local_squeeze_excitation.1} parent=51 // pred_region
          %s413 = smul.u32 2, %s24
          %p414 = scmp.lt.s32.totalorder %s23, 1
          %s415 = scalar_select %p414, %s23, 1
          %p416 = scmp.lt.s32.totalorder %s413, 1
          %s417 = scalar_select %p416, %s413, 1
          %s418 = smul.addr %s415, 2
          %s419 = sadd.s32 %s417, %s418
          %s420 = smul.addr %s419, 4
          %s421 = scalar_lea.vmem %s5, %s420
        $region56: #{local_squeeze_excitation.1} parent=51 // pred_fallthru
          _
      $region52: #{local_squeeze_excitation.1} parent=5 // pred_fallthru
        _
    $region6: #{local_squeeze_excitation.1} parent=1 // loop_footer
      %s16 = sadd.s32 1, %s12
    $region7: #{local_squeeze_excitation.1} parent=1 // loop_footer_branch
      %11 = sbr.rel target = $region3
    $region8: #{local_squeeze_excitation.1} parent=1 // loop_exit
      _
    %422 = vsyncpa [#allocation3], 1
    %s423 = scalar_lea.sflag [#allocation3], 1
    %424 = vsyncpa %s423, 1

</llo_original>
